<compile_context>
chip_gen: v7x
topology: tpu7x:2x2x1
jax: 0.10.0
libtpu: 0.0.40
codegen_flags: <defaults>
</compile_context>

<pallas_src>
import functools

import jax
import jax.numpy as jnp
from jax import lax
from jax.experimental import pallas as pl
from jax.experimental.pallas import tpu as pltpu


# --------------------------- small helpers --------------------------------- #

def _round_up(x, m):
    return (x + m - 1) // m * m


def _is_v7x():
    try:
        kind = jax.devices()[0].device_kind.lower()
    except Exception:
        return False
    return "7" in kind


def _vmem_limit_bytes():
    # v7x has 64 MiB of physical VMEM per TensorCore -> stay well below it.
    # v5e / v6e (and v4/v5p) have 128 MiB -> allow a much larger scoped limit.
    if _is_v7x():
        return 48 * 1024 * 1024
    return 96 * 1024 * 1024


def _largest_divisor_tile(dim, unit, cap):
    """Largest multiple of `unit` that divides `dim` and is <= cap.
    (`dim` is a multiple of `unit`, so `unit` always qualifies: zero padding.)"""
    best = unit
    t = unit
    limit = min(cap, dim)
    while t <= limit:
        if dim % t == 0:
            best = t
        t += unit
    return best


def _scored_tile(dim, unit, cap):
    """Pick a tile (multiple of `unit`, <= cap) trading padding waste against
    per-grid-step overhead (`dim` is already a multiple of `unit`)."""
    best_t, best_cost = unit, None
    overhead = 64  # one grid step costs roughly as much as ~64 extra rows
    t = unit
    limit = min(cap, dim)
    while t <= limit:
        padded = _round_up(dim, t)
        cost = padded * (1.0 + overhead / t)
        if best_cost is None or cost < best_cost - 1e-9:
            best_t, best_cost = t, cost
        t += unit
    return best_t


def _select_tiles(n_pad8, k_p, f_p, w_item, out_item, bn, vmem_limit):
    """Pick (tm, tn, tk).  tn/tk divide the 128-padded feature dims exactly
    (no phantom work); tm allows bounded padding.  Shrink caps if the
    double-buffered footprint would exceed the scoped-VMEM budget."""
    caps = [512, 512, 2048]            # tm, tn, tk upper bounds
    budget = int(vmem_limit * 0.8)
    tm = tn = tk = None
    for _ in range(16):
        tm = _scored_tile(n_pad8, 8, caps[0])
        tn = _largest_divisor_tile(f_p, 128, caps[1])
        tk = _largest_divisor_tile(k_p, 128, caps[2])
        out_bytes = 4 if bn else out_item          # BN pass 1 writes f32 y
        footprint = (2 * tm * tk * 4               # x block x2 (f32 worst case)
                     + 2 * tk * tn * w_item        # w block x2
                     + 2 * tm * tn * out_bytes     # output block x2
                     + tm * tn * 4                 # f32 accumulator scratch
                     + 16 * tn * 4)                # (1, tn) vectors
        if footprint <= budget:
            break
        if caps[2] > 256:
            caps[2] //= 2
        elif caps[1] > 128:
            caps[1] //= 2
        elif caps[0] > 64:
            caps[0] //= 2
        else:
            break
    return tm, tn, tk


def _dim_semantics(block_counts, n_parallel):
    """parallel/arbitrary semantics per grid axis; on v7x the leading parallel
    axis is marked CORE_PARALLEL (split across the 2 TensorCores) when it
    splits evenly across them."""
    sems = []
    for ax, nb in enumerate(block_counts):
        if ax < n_parallel:
            if ax == 0 and nb >= 2 and nb % 2 == 0 and _is_v7x():
                sems.append(pltpu.CORE_PARALLEL)
            else:
                sems.append(pltpu.PARALLEL)
        else:
            sems.append(pltpu.ARBITRARY)
    return tuple(sems)


# ----------------------------- kernels ------------------------------------- #

def _fc_relu_kernel(x_ref, w_ref, b_ref, o_ref, acc_ref):
    """grid = (i: N tiles, j: F tiles, k: K tiles); acc is a (tm, tn) f32 scratch."""
    k = pl.program_id(2)

    @pl.when(k == 0)
    def _():
        acc_ref[...] = jnp.zeros_like(acc_ref)

    acc_ref[...] += jnp.dot(x_ref[...].astype(w_ref.dtype), w_ref[...],
                            preferred_element_type=jnp.float32)

    @pl.when(k == pl.num_programs(2) - 1)
    def _():
        y = acc_ref[...] + b_ref[...]
        o_ref[...] = jnp.maximum(y, 0.0).astype(o_ref.dtype)


def _fc_bn_stats_kernel(n_actual, tm, x_ref, w_ref, b_ref,
                        y_ref, sum_ref, sq_ref,
                        acc_ref, sum_acc, sq_acc):
    """BN pass 1. grid = (j: F tiles, i: N tiles, k: K tiles).
    Writes y = x @ W^T + b (f32) to HBM and accumulates per-feature sum and
    sum-of-squares over the real (unpadded) rows only."""
    i = pl.program_id(1)
    k = pl.program_id(2)
    n_i = pl.num_programs(1)
    n_k = pl.num_programs(2)

    @pl.when(k == 0)
    def _():
        acc_ref[...] = jnp.zeros_like(acc_ref)

    @pl.when(jnp.logical_and(i == 0, k == 0))
    def _():
        sum_acc[...] = jnp.zeros_like(sum_acc)
        sq_acc[...] = jnp.zeros_like(sq_acc)

    acc_ref[...] += jnp.dot(x_ref[...].astype(w_ref.dtype), w_ref[...],
                            preferred_element_type=jnp.float32)

    @pl.when(k == n_k - 1)
    def _():
        y = acc_ref[...] + b_ref[...]
        y_ref[...] = y
        # Padded rows of x are zero, so y there equals the bias -> mask them out
        # of the batch statistics.
        row = lax.broadcasted_iota(jnp.int32, y.shape, 0) + i * tm
        ym = jnp.where(row < n_actual, y, 0.0)
        sum_acc[...] += jnp.sum(ym, axis=0, keepdims=True)
        sq_acc[...] += jnp.sum(ym * ym, axis=0, keepdims=True)

    @pl.when(jnp.logical_and(i == n_i - 1, k == n_k - 1))
    def _():
        sum_ref[...] = sum_acc[...]
        sq_ref[...] = sq_acc[...]


def _scale_shift_relu_kernel(y_ref, scale_ref, shift_ref, o_ref):
    """BN pass 2. grid = (i: N tiles, j: F tiles). Tiled elementwise epilogue."""
    o_ref[...] = jnp.maximum(
        y_ref[...] * scale_ref[...] + shift_ref[...], 0.0).astype(o_ref.dtype)


# ----------------------------- wrappers ------------------------------------ #

def prepare_fc_params(w, b, gamma=None, beta=None, *, mxu_dtype=jnp.float32):
    """One-time parameter prep, hoisted out of the per-call hot path:
    transpose weight to (K, F), pad feature dims to multiples of 128 only
    (not to the tile size), cast the weight to the MXU input dtype."""
    out_f, in_f = w.shape
    k_p = _round_up(in_f, 128)
    f_p = _round_up(out_f, 128)
    wt = jnp.pad(w.T, ((0, k_p - in_f), (0, f_p - out_f))).astype(mxu_dtype)
    b_p = jnp.pad(b, (0, f_p - out_f)).reshape(1, f_p).astype(jnp.float32)
    g_p = be_p = None
    if gamma is not None:
        g_p = jnp.pad(gamma, (0, f_p - out_f)).reshape(1, f_p).astype(jnp.float32)
        be_p = jnp.pad(beta, (0, f_p - out_f)).reshape(1, f_p).astype(jnp.float32)
    return {"wt": wt, "b": b_p, "gamma": g_p, "beta": be_p,
            "in_features": in_f, "out_features": out_f}


@functools.partial(
    jax.jit,
    static_argnames=("in_features", "out_features", "use_norm",
                     "mxu_dtype", "out_dtype"))
def fc_block_apply(x, wt, b, gamma, beta, *, in_features, out_features,
                   use_norm=False, mxu_dtype=jnp.float32,
                   out_dtype=jnp.float32):
    """FCBlock forward: y = x @ W^T + b, optional BatchNorm1d (batch statistics,
    training mode), ReLU.  `wt`/`b`/`gamma`/`beta` come from prepare_fc_params."""
    n = x.shape[0]
    k_p, f_p = wt.shape
    w_item = jnp.dtype(mxu_dtype).itemsize
    out_item = jnp.dtype(out_dtype).itemsize

    vmem_limit = _vmem_limit_bytes()
    n_pad8 = _round_up(max(n, 8), 8)
    tm, tn, tk = _select_tiles(n_pad8, k_p, f_p, w_item, out_item,
                               bn=use_norm, vmem_limit=vmem_limit)
    n_p = _round_up(n_pad8, tm)
    gi, gj, gk = n_p // tm, f_p // tn, k_p // tk

    # Only pre-cast x to a narrower MXU dtype when each x element is re-read
    # (once per F tile); otherwise the cast pre-pass costs more HBM traffic
    # than it saves and the kernel casts the block after a single f32 read.
    x_dtype = x.dtype
    if w_item < jnp.dtype(x.dtype).itemsize and gj > 1:
        x_dtype = mxu_dtype
    x_p = jnp.pad(x, ((0, n_p - n), (0, k_p - in_features))).astype(x_dtype)
    x_item = jnp.dtype(x_dtype).itemsize

    # HBM bytes including re-reads (x read gj times, w read gi times).
    mm_bytes = n_p * k_p * x_item * gj + k_p * f_p * w_item * gi

    if not use_norm:
        cost = pl.CostEstimate(
            flops=2 * n_p * k_p * f_p, transcendentals=0,
            bytes_accessed=int(mm_bytes + n_p * f_p * out_item))
        out = pl.pallas_call(
            _fc_relu_kernel,
            out_shape=jax.ShapeDtypeStruct((n_p, f_p), out_dtype),
            grid_spec=pltpu.PrefetchScalarGridSpec(
                num_scalar_prefetch=0,
                grid=(gi, gj, gk),
                in_specs=[
                    pl.BlockSpec((tm, tk), lambda i, j, k: (i, k)),
                    pl.BlockSpec((tk, tn), lambda i, j, k: (k, j)),
                    pl.BlockSpec((1, tn), lambda i, j, k: (0, j)),
                ],
                out_specs=pl.BlockSpec((tm, tn), lambda i, j, k: (i, j)),
                scratch_shapes=[pltpu.VMEM((tm, tn), jnp.float32)],
            ),
            compiler_params=pltpu.CompilerParams(
                dimension_semantics=_dim_semantics((gi, gj, gk), n_parallel=2),
                vmem_limit_bytes=vmem_limit),
            cost_estimate=cost,
        )(x_p, wt, b)
        return out[:n, :out_features]

    # ---- BN pass 1: tiled matmul, y -> HBM, per-feature sum / sum-sq ------- #
    cost1 = pl.CostEstimate(
        flops=2 * n_p * k_p * f_p, transcendentals=0,
        bytes_accessed=int(mm_bytes + n_p * f_p * 4 + 2 * f_p * 4))
    y_full, col_sum, col_sq = pl.pallas_call(
        functools.partial(_fc_bn_stats_kernel, n, tm),
        out_shape=(jax.ShapeDtypeStruct((n_p, f_p), jnp.float32),
                   jax.ShapeDtypeStruct((1, f_p), jnp.float32),
                   jax.ShapeDtypeStruct((1, f_p), jnp.float32)),
        grid_spec=pltpu.PrefetchScalarGridSpec(
            num_scalar_prefetch=0,
            grid=(gj, gi, gk),
            in_specs=[
                pl.BlockSpec((tm, tk), lambda j, i, k: (i, k)),
                pl.BlockSpec((tk, tn), lambda j, i, k: (k, j)),
                pl.BlockSpec((1, tn), lambda j, i, k: (0, j)),
            ],
            out_specs=(
                pl.BlockSpec((tm, tn), lambda j, i, k: (i, j)),
                pl.BlockSpec((1, tn), lambda j, i, k: (0, j)),
                pl.BlockSpec((1, tn), lambda j, i, k: (0, j)),
            ),
            scratch_shapes=[pltpu.VMEM((tm, tn), jnp.float32),
                            pltpu.VMEM((1, tn), jnp.float32),
                            pltpu.VMEM((1, tn), jnp.float32)],
        ),
        compiler_params=pltpu.CompilerParams(
            dimension_semantics=_dim_semantics((gj, gi, gk), n_parallel=1),
            vmem_limit_bytes=vmem_limit),
        cost_estimate=cost1,
    )(x_p, wt, b)

    # Batch statistics (training-mode BatchNorm1d, biased variance, eps=1e-5)
    # on tiny (1, f_p) vectors: plain XLA is fine here.
    # TODO(synk): BatchNorm1d running_mean/var tracking (momentum update, eval
    # mode) is not implemented; the forward uses batch statistics as in training.
    inv_n = 1.0 / n
    mean = col_sum * inv_n
    var = jnp.maximum(col_sq * inv_n - mean * mean, 0.0)
    scale = gamma * lax.rsqrt(var + 1e-5)
    shift = beta - mean * scale

    # ---- BN pass 2: tiled elementwise y * scale + shift -> ReLU ------------ #
    cost2 = pl.CostEstimate(
        flops=3 * n_p * f_p, transcendentals=0,
        bytes_accessed=int(n_p * f_p * (4 + out_item)))
    out = pl.pallas_call(
        _scale_shift_relu_kernel,
        out_shape=jax.ShapeDtypeStruct((n_p, f_p), out_dtype),
        grid_spec=pltpu.PrefetchScalarGridSpec(
            num_scalar_prefetch=0,
            grid=(gi, gj),
            in_specs=[
                pl.BlockSpec((tm, tn), lambda i, j: (i, j)),
                pl.BlockSpec((1, tn), lambda i, j: (0, j)),
                pl.BlockSpec((1, tn), lambda i, j: (0, j)),
            ],
            out_specs=pl.BlockSpec((tm, tn), lambda i, j: (i, j)),
        ),
        compiler_params=pltpu.CompilerParams(
            dimension_semantics=_dim_semantics((gi, gj), n_parallel=2),
            vmem_limit_bytes=vmem_limit),
        cost_estimate=cost2,
    )(y_full, scale, shift)
    return out[:n, :out_features]


def fc_block(x, w, b, gamma=None, beta=None, *, use_norm=False,
             mxu_dtype=jnp.float32, out_dtype=jnp.float32):
    """Convenience wrapper (prepare + apply).  In a real model call
    prepare_fc_params once per layer and reuse the result across steps."""
    p = prepare_fc_params(w, b, gamma, beta, mxu_dtype=mxu_dtype)
    return fc_block_apply(
        x, p["wt"], p["b"], p["gamma"], p["beta"],
        in_features=p["in_features"], out_features=p["out_features"],
        use_norm=use_norm, mxu_dtype=mxu_dtype, out_dtype=out_dtype)


# ----------------------------- reference ----------------------------------- #

def fc_block_ref(x, w, b, gamma=None, beta=None, *, use_norm=False):
    y = jnp.dot(x.astype(jnp.float32), w.astype(jnp.float32).T,
                precision=lax.Precision.HIGHEST) + b
    if use_norm:
        mean = jnp.mean(y, axis=0, keepdims=True)
        var = jnp.mean((y - mean) ** 2, axis=0, keepdims=True)
        y = (y - mean) / jnp.sqrt(var + 1e-5)
        y = y * gamma + beta
    return jnp.maximum(y, 0.0)


# ----------------------------- main ----------------------------------------- #

if __name__ == "__main__":
    key = jax.random.PRNGKey(0)
    k_x, k_w, k_b, k_x2, k_w2, k_b2 = jax.random.split(key, 6)

    # ----- small shapes (sanity / tight-tolerance checks) ------------------- #
    batch, in_features, out_features = 8, 32, 64
    x = jax.random.normal(k_x, (batch, in_features), dtype=jnp.float32)
    bound = 1.0 / float(in_features) ** 0.5
    w = jax.random.uniform(k_w, (out_features, in_features),
                           minval=-bound, maxval=bound, dtype=jnp.float32)
    b = jax.random.uniform(k_b, (out_features,),
                           minval=-bound, maxval=bound, dtype=jnp.float32)
    gamma = jnp.full((out_features,), 1.1, jnp.float32)
    beta = jnp.full((out_features,), 0.05, jnp.float32)

    ref = fc_block_ref(x, w, b, use_norm=False)
    out = jax.block_until_ready(fc_block(x, w, b, use_norm=False))
    assert jnp.allclose(out, ref, atol=1e-5, rtol=1e-5), "small no-norm f32"

    ref_bn = fc_block_ref(x, w, b, gamma, beta, use_norm=True)
    out_bn = jax.block_until_ready(fc_block(x, w, b, gamma, beta, use_norm=True))
    assert jnp.allclose(out_bn, ref_bn, atol=1e-4, rtol=1e-4), "small BN f32"

    out16 = jax.block_until_ready(
        fc_block(x, w, b, use_norm=False, mxu_dtype=jnp.bfloat16))
    assert jnp.allclose(out16, ref, atol=3e-2, rtol=3e-2), "small no-norm bf16 MXU"

    outb = jax.block_until_ready(
        fc_block(x, w, b, use_norm=False, out_dtype=jnp.bfloat16))
    assert outb.dtype == jnp.bfloat16
    assert jnp.allclose(outb.astype(jnp.float32), ref, atol=2e-2, rtol=2e-2), \
        "small no-norm bf16 output"

    # ----- medium shapes: multi-tile grid, K accumulation, hoisted prep ----- #
    n2, in2, out2 = 1024, 2304, 1024
    x2 = jax.random.normal(k_x2, (n2, in2), dtype=jnp.float32)
    bound2 = 1.0 / float(in2) ** 0.5
    w2 = jax.random.uniform(k_w2, (out2, in2), minval=-bound2, maxval=bound2,
                            dtype=jnp.float32)
    b2 = jax.random.uniform(k_b2, (out2,), minval=-bound2, maxval=bound2,
                            dtype=jnp.float32)
    params2 = prepare_fc_params(w2, b2)            # prepared once, reusable
    ref2 = fc_block_ref(x2, w2, b2, use_norm=False)
    out2_ = jax.block_until_ready(fc_block_apply(
        x2, params2["wt"], params2["b"], None, None,
        in_features=in2, out_features=out2, use_norm=False))
    assert jnp.allclose(out2_, ref2, atol=2e-3, rtol=2e-3), "medium no-norm f32"

    # ----- medium BN: two-pass stats, padded-row masking, multi F tiles ----- #
    n3, in3, out3 = 1018, 384, 640
    k_x3, k_w3, k_b3 = jax.random.split(jax.random.PRNGKey(1), 3)
    x3 = jax.random.normal(k_x3, (n3, in3), dtype=jnp.float32)
    bound3 = 1.0 / float(in3) ** 0.5
    w3 = jax.random.uniform(k_w3, (out3, in3), minval=-bound3, maxval=bound3,
                            dtype=jnp.float32)
    b3 = jax.random.uniform(k_b3, (out3,), minval=-bound3, maxval=bound3,
                            dtype=jnp.float32)
    g3 = jax.random.uniform(k_b3, (out3,), minval=0.5, maxval=1.5,
                            dtype=jnp.float32)
    be3 = jnp.zeros((out3,), jnp.float32)
    ref3 = fc_block_ref(x3, w3, b3, g3, be3, use_norm=True)
    out3_ = jax.block_until_ready(fc_block(x3, w3, b3, g3, be3, use_norm=True))
    assert jnp.allclose(out3_, ref3, atol=2e-3, rtol=2e-3), "medium BN f32"

    print("KERNEL_OK")
</pallas_src>

<mosaic_0001>
module attributes {stable_mosaic.version = 11 : i64} {
  func.func @_fc_relu_kernel(%arg0: i32, %arg1: i32, %arg2: i32, %arg3: memref<8x128xf32, #tpu.memory_space<vmem>>, %arg4: memref<128x128xf32, #tpu.memory_space<vmem>>, %arg5: memref<1x128xf32, #tpu.memory_space<vmem>>, %arg6: memref<8x128xf32, #tpu.memory_space<vmem>>, %arg7: memref<8x128xf32, #tpu.memory_space<vmem>>) attributes {dimension_semantics = [#tpu.dimension_semantics<parallel>, #tpu.dimension_semantics<parallel>, #tpu.dimension_semantics<arbitrary>], iteration_bounds = array<i64: 1, 1, 1>, scalar_prefetch = 0 : i64, scratch_operands = 1 : i64, tpu.core_type = #tpu.core_type<tc>, window_params = [{transform_indices = @transform_0, window_bounds = array<i64: 8, 128>}, {transform_indices = @transform_1, window_bounds = array<i64: 128, 128>}, {transform_indices = @transform_2, window_bounds = array<i64: 1, 128>}, {transform_indices = @transform_3, window_bounds = array<i64: 8, 128>}]} {
    %c0_i32 = arith.constant 0 : i32
    %0 = arith.cmpi eq, %arg2, %c0_i32 : i32
    %1 = arith.extui %0 : i1 to i32
    %c0_i32_0 = arith.constant 0 : i32
    %2 = arith.cmpi ne, %1, %c0_i32_0 : i32
    scf.if %2 {
      %cst_10 = arith.constant 0.000000e+00 : f32
      %12 = vector.broadcast %cst_10 : f32 to vector<8x128xf32>
      %c0_11 = arith.constant 0 : index
      %c0_12 = arith.constant 0 : index
      %13 = vector.load %arg7[%c0_11, %c0_12] : memref<8x128xf32, #tpu.memory_space<vmem>>, vector<8x128xf32>
      tpu.vector_store %arg7[%c0_11, %c0_12], %12 {strides = array<i32>} : memref<8x128xf32, #tpu.memory_space<vmem>>, vector<8x128xf32>,
    } else {
    }
    %c0 = arith.constant 0 : index
    %c0_1 = arith.constant 0 : index
    %3 = vector.load %arg7[%c0, %c0_1] : memref<8x128xf32, #tpu.memory_space<vmem>>, vector<8x128xf32>
    %c0_2 = arith.constant 0 : index
    %c0_3 = arith.constant 0 : index
    %4 = vector.load %arg3[%c0_2, %c0_3] : memref<8x128xf32, #tpu.memory_space<vmem>>, vector<8x128xf32>
    %c0_4 = arith.constant 0 : index
    %c0_5 = arith.constant 0 : index
    %5 = vector.load %arg4[%c0_4, %c0_5] : memref<128x128xf32, #tpu.memory_space<vmem>>, vector<128x128xf32>
    %cst = arith.constant dense<0.000000e+00> : vector<8x128xf32>
    %6 = tpu.matmul %4, %5, %cst {dimension_numbers = #tpu.dot_dimension_numbers<[1], [0], [0], [1], [0, 0, 1, 1], [], []>} : vector<8x128xf32>, vector<128x128xf32>, vector<8x128xf32> -> vector<8x128xf32>
    %7 = arith.addf %3, %6 : vector<8x128xf32>
    %c0_6 = arith.constant 0 : index
    %c0_7 = arith.constant 0 : index
    %8 = vector.load %arg7[%c0_6, %c0_7] : memref<8x128xf32, #tpu.memory_space<vmem>>, vector<8x128xf32>
    tpu.vector_store %arg7[%c0_6, %c0_7], %7 {strides = array<i32>} : memref<8x128xf32, #tpu.memory_space<vmem>>, vector<8x128xf32>,
    %c0_i32_8 = arith.constant 0 : i32
    %9 = arith.cmpi eq, %arg2, %c0_i32_8 : i32
    %10 = arith.extui %9 : i1 to i32
    %c0_i32_9 = arith.constant 0 : i32
    %11 = arith.cmpi ne, %10, %c0_i32_9 : i32
    scf.if %11 {
      %c0_10 = arith.constant 0 : index
      %c0_11 = arith.constant 0 : index
      %12 = vector.load %arg7[%c0_10, %c0_11] : memref<8x128xf32, #tpu.memory_space<vmem>>, vector<8x128xf32>
      %c0_12 = arith.constant 0 : index
      %c0_13 = arith.constant 0 : index
      %13 = vector.load %arg5[%c0_12, %c0_13] : memref<1x128xf32, #tpu.memory_space<vmem>>, vector<1x128xf32>
      %14 = vector.broadcast %13 : vector<1x128xf32> to vector<8x128xf32>
      %15 = arith.addf %12, %14 : vector<8x128xf32>
      %cst_14 = arith.constant 0.000000e+00 : f32
      %16 = vector.broadcast %cst_14 : f32 to vector<8x128xf32>
      %17 = arith.maximumf %15, %16 : vector<8x128xf32>
      %c0_15 = arith.constant 0 : index
      %c0_16 = arith.constant 0 : index
      %18 = vector.load %arg6[%c0_15, %c0_16] : memref<8x128xf32, #tpu.memory_space<vmem>>, vector<8x128xf32>
      tpu.vector_store %arg6[%c0_15, %c0_16], %17 {strides = array<i32>} : memref<8x128xf32, #tpu.memory_space<vmem>>, vector<8x128xf32>,
    } else {
    }
    return
  }
  func.func @transform_0(%arg0: i32, %arg1: i32, %arg2: i32) -> (i32, i32) {
    %c0_i32 = arith.constant 0 : i32
    return %arg0, %arg2 : i32, i32
  }
  func.func @transform_1(%arg0: i32, %arg1: i32, %arg2: i32) -> (i32, i32) {
    %c0_i32 = arith.constant 0 : i32
    return %arg2, %arg1 : i32, i32
  }
  func.func @transform_2(%arg0: i32, %arg1: i32, %arg2: i32) -> (i32, i32) {
    %c0_i32 = arith.constant 0 : i32
    %c0_i32_0 = arith.constant 0 : i32
    return %c0_i32, %arg1 : i32, i32
  }
  func.func @transform_3(%arg0: i32, %arg1: i32, %arg2: i32) -> (i32, i32) {
    %c0_i32 = arith.constant 0 : i32
    return %arg0, %arg1 : i32, i32
  }
}

</mosaic_0001>

<llo_original>
// kernel: fc_block_apply.1
$region0: #{fc_block_apply.1}
  #allocation0 [shape = 'u32[]', space=smem, size = 0x4, offset = 0x4, fixed_abs, tag = 'smem constant byte address 0x4 - core index']
  #allocation1 [shape = 'u32[144,128]{1,0:T(1,128)}', space=vmem, size = 0x12000, scoped, tag = 'internal scratch']
  #allocation2 [shape = 'f32[8,128]{1,0:T(8,128)}', space=vmem, size = 0x1000, scoped, tag = 'scratch operand']
  %s0 = inlined_call_operand.hbm [shape: f32[8,128], index: 0, kind: input, shape index: {}]
  %s1 = inlined_call_operand.hbm [shape: f32[128,128], index: 1, kind: input, shape index: {}]
  %s2 = inlined_call_operand.hbm [shape: f32[1,128], index: 2, kind: input, shape index: {}]
  %s3 = inlined_call_operand.hbm [shape: f32[8,128], index: 3, kind: output, shape index: {}]
  %s4 = sld [smem:[#allocation0]]
  $region42: #{fc_block_apply.1} parent=0
    _
  %s6 = ssub.s32 1, %s4
  %s7 = scalar_select 0, %s6, %s4
  $region1: #{fc_block_apply.1} parent=0
    #allocation3 [shape = 'u8[4096]{0}', space=vmem, size = 0x1000, scoped, tag = 'input window, operand 0, single buffered']
    #allocation4 [shape = 's32[1]{0}', space=sflag, size = 0x4, scoped, tag = 'scoped memory for fc_block_apply.1']
    #allocation5 [shape = 's32[1]{0}', space=sflag, size = 0x4, scoped, tag = 'scoped memory for fc_block_apply.1']
    #allocation6 [shape = 'u8[65536]{0}', space=vmem, size = 0x10000, scoped, tag = 'input window, operand 1, single buffered']
    #allocation7 [shape = 's32[1]{0}', space=sflag, size = 0x4, scoped, tag = 'scoped memory for fc_block_apply.1']
    #allocation8 [shape = 'u8[512]{0}', space=vmem, size = 0x400, scoped, tag = 'input window, operand 2, single buffered']
    #allocation9 [shape = 'u8[4096]{0}', space=vmem, size = 0x1000, scoped, tag = 'output window, operand 0, single buffered']
    %8 = vsyncpa [#allocation4], 0
    %9 = vsyncpa [#allocation7], 0
    %10 = vsyncpa [#allocation5], 0
    // Predicated region
    $region2: #{fc_block_apply.1} parent=1 // pred_check
      _
    $region3: #{fc_block_apply.1} parent=1 // pred_check_branch
      %12 = sbr.rel (0) target = $region5
    $region4: #{fc_block_apply.1} parent=1 // pred_region
      %s14 = ssub.s32 128, 128
      %15 = vsyncadd [#allocation4], %s14
      %s17 = sshll.u32 [#allocation3], 4
      %s18 = int_to_ptr.vmem [resolvable:$true] %s17
      %20 = dma.hbm_to_vmem [thread:$0]  %s0, 128, %s18, [#allocation4]
    $region5: #{fc_block_apply.1} parent=1 // pred_fallthru
      _
    // Predicated region
    $region6: #{fc_block_apply.1} parent=1 // pred_check
      _
    $region7: #{fc_block_apply.1} parent=1 // pred_check_branch
      %22 = sbr.rel (0) target = $region9
    $region8: #{fc_block_apply.1} parent=1 // pred_region
      %s24 = ssub.s32 2048, 2048
      %25 = vsyncadd [#allocation7], %s24
      %s26 = sshll.u32 [#allocation6], 4
      %s27 = int_to_ptr.vmem [resolvable:$true] %s26
      %32 = dma.hbm_to_vmem [thread:$0]  %s1, 2048, %s27, [#allocation7], 128, 128, 8
    $region9: #{fc_block_apply.1} parent=1 // pred_fallthru
      _
    // Predicated region
    $region10: #{fc_block_apply.1} parent=1 // pred_check
      _
    $region11: #{fc_block_apply.1} parent=1 // pred_check_branch
      %34 = sbr.rel (0) target = $region13
    $region12: #{fc_block_apply.1} parent=1 // pred_region
      %s36 = ssub.s32 16, 16
      %37 = vsyncadd [#allocation7], %s36
      %s39 = sshll.u32 [#allocation8], 4
      %s40 = int_to_ptr.vmem [resolvable:$true] %s39
      %42 = dma.hbm_to_vmem [thread:$0]  %s2, 16, %s40, [#allocation7]
    $region13: #{fc_block_apply.1} parent=1 // pred_fallthru
      _
    // Predicated region
    $region14: #{fc_block_apply.1} parent=1 // pred_check
      _
    $region15: #{fc_block_apply.1} parent=1 // pred_check_branch
      %44 = sbr.rel (0) target = $region17
    $region16: #{fc_block_apply.1} parent=1 // pred_region
      %45 = dma.done [#allocation4], 128
    $region17: #{fc_block_apply.1} parent=1 // pred_fallthru
      _
    // Predicated region
    $region18: #{fc_block_apply.1} parent=1 // pred_check
      _
    $region19: #{fc_block_apply.1} parent=1 // pred_check_branch
      %47 = sbr.rel (0) target = $region21
    $region20: #{fc_block_apply.1} parent=1 // pred_region
      %48 = dma.done [#allocation7], 2048
    $region21: #{fc_block_apply.1} parent=1 // pred_fallthru
      _
    // Predicated region
    $region22: #{fc_block_apply.1} parent=1 // pred_check
      _
    $region23: #{fc_block_apply.1} parent=1 // pred_check_branch
      %50 = sbr.rel (0) target = $region25
    $region24: #{fc_block_apply.1} parent=1 // pred_region
      %51 = dma.done [#allocation7], 16
    $region25: #{fc_block_apply.1} parent=1 // pred_fallthru
      _
    %p52 = scmp.eq.s32.totalorder 0, 0
    // Predicated region
    $region26: #{fc_block_apply.1} parent=1 // pred_check
      %p53 = pneg %p52
    $region27: #{fc_block_apply.1} parent=1 // pred_check_branch
      %55 = sbr.rel (%p53) target = $region29
    $region28: #{fc_block_apply.1} parent=1 // pred_region
      %56 = vst [vmem:[#allocation2] sm:$0xff] 0.0
    $region29: #{fc_block_apply.1} parent=1 // pred_fallthru
      _
    %v57 = vld [vmem:[#allocation2] sm:$0xff]
    %v58 = vld [vmem:[#allocation3] sm:$0xff]
    %v59 = vld [vmem:[#allocation6] sm:$0xff]
    %v60 = vld [vmem:[#allocation6 + $0x8] sm:$0xff]
    %v61 = vld [vmem:[#allocation6 + $0x10] sm:$0xff]
    %v62 = vld [vmem:[#allocation6 + $0x18] sm:$0xff]
    %v63 = vld [vmem:[#allocation6 + $0x20] sm:$0xff]
    %v64 = vld [vmem:[#allocation6 + $0x28] sm:$0xff]
    %v65 = vld [vmem:[#allocation6 + $0x30] sm:$0xff]
    %v66 = vld [vmem:[#allocation6 + $0x38] sm:$0xff]
    %v67 = vld [vmem:[#allocation6 + $0x40] sm:$0xff]
    %v68 = vld [vmem:[#allocation6 + $0x48] sm:$0xff]
    %v69 = vld [vmem:[#allocation6 + $0x50] sm:$0xff]
    %v70 = vld [vmem:[#allocation6 + $0x58] sm:$0xff]
    %v71 = vld [vmem:[#allocation6 + $0x60] sm:$0xff]
    %v72 = vld [vmem:[#allocation6 + $0x68] sm:$0xff]
    %v73 = vld [vmem:[#allocation6 + $0x70] sm:$0xff]
    %v74 = vld [vmem:[#allocation6 + $0x78] sm:$0xff]
    %75 = vmatprep.subr.mxu0 0.0
    %76 = vmatpush1.msra.mxu0 %v59
    %77 = vmatprep.subr.mxu0 0.0
    %78 = vmatpush1.msra.mxu0 %v60
    %79 = vmatprep.subr.mxu0 0.0
    %80 = vmatpush1.msra.mxu0 %v61
    %81 = vmatprep.subr.mxu0 0.0
    %82 = vmatpush1.msra.mxu0 %v62
    %83 = vmatprep.subr.mxu0 0.0
    %84 = vmatpush1.msra.mxu0 %v63
    %85 = vmatprep.subr.mxu0 0.0
    %86 = vmatpush1.msra.mxu0 %v64
    %87 = vmatprep.subr.mxu0 0.0
    %88 = vmatpush1.msra.mxu0 %v65
    %89 = vmatprep.subr.mxu0 0.0
    %90 = vmatpush1.msra.mxu0 %v66
    %91 = vmatprep.subr.mxu0 0.0
    %92 = vmatpush1.msra.mxu0 %v67
    %93 = vmatprep.subr.mxu0 0.0
    %94 = vmatpush1.msra.mxu0 %v68
    %95 = vmatprep.subr.mxu0 0.0
    %96 = vmatpush1.msra.mxu0 %v69
    %97 = vmatprep.subr.mxu0 0.0
    %98 = vmatpush1.msra.mxu0 %v70
    %99 = vmatprep.subr.mxu0 0.0
    %100 = vmatpush1.msra.mxu0 %v71
    %101 = vmatprep.subr.mxu0 0.0
    %102 = vmatpush1.msra.mxu0 %v72
    %103 = vmatprep.subr.mxu0 0.0
    %104 = vmatpush1.msra.mxu0 %v73
    %105 = vmatprep.subr.mxu0 0.0
    %106 = vmatpush1.msra.mxu0 %v74
    %107 = vmatprep.subr.mxu0 0.0
    %108 = vmatpush1.msra.mxu0 0.0
    %109 = vmatprep.subr.mxu0 0.0
    %110 = vmatpush1.msra.mxu0 0.0
    %111 = vmatprep.subr.mxu0 0.0
    %112 = vmatpush1.msra.mxu0 0.0
    %113 = vmatprep.subr.mxu0 0.0
    %114 = vmatpush1.msra.mxu0 0.0
    %115 = vmatprep.subr.mxu0 0.0
    %116 = vmatpush1.msra.mxu0 0.0
    %117 = vmatprep.subr.mxu0 0.0
    %118 = vmatpush1.msra.mxu0 0.0
    %119 = vmatprep.subr.mxu0 0.0
    %120 = vmatpush1.msra.mxu0 0.0
    %121 = vmatprep.subr.mxu0 0.0
    %122 = vmatpush1.msra.mxu0 0.0
    %123 = vmatprep.subr.mxu0 0.0
    %124 = vmatpush1.msra.mxu0 0.0
    %125 = vmatprep.subr.mxu0 0.0
    %126 = vmatpush1.msra.mxu0 0.0
    %127 = vmatprep.subr.mxu0 0.0
    %128 = vmatpush1.msra.mxu0 0.0
    %129 = vmatprep.subr.mxu0 0.0
    %130 = vmatpush1.msra.mxu0 0.0
    %131 = vmatprep.subr.mxu0 0.0
    %132 = vmatpush1.msra.mxu0 0.0
    %133 = vmatprep.subr.mxu0 0.0
    %134 = vmatpush1.msra.mxu0 0.0
    %135 = vmatprep.subr.mxu0 0.0
    %136 = vmatpush1.msra.mxu0 0.0
    %137 = vmatprep.subr.mxu0 0.0
    %138 = vmatpush1.msra.mxu0 0.0
    %139 = vmatprep.mubr.f32.mxu0 0.0
    %140 = vmatmul.mubr.f32.gmra.mrb[0].mxu0 %v58
    %v141 = vpop.f32.mrb[0].mxu0
    %v142 = vadd.f32 0.0, %v141
    %v143 = vpop.f32.mrb[0].mxu0
    %144 = vdwg.mxu0
    %v145 = vadd.f32 %v57, %v142
    %146 = vst [vmem:[#allocation2] sm:$0xff] %v145
    // Predicated region
    $region30: #{fc_block_apply.1} parent=1 // pred_check
      %p147 = pneg %p52
    $region31: #{fc_block_apply.1} parent=1 // pred_check_branch
      %149 = sbr.rel (%p147) target = $region33
    $region32: #{fc_block_apply.1} parent=1 // pred_region
      %v150 = vld [vmem:[#allocation2] sm:$0xff]
      %v151 = vld [vmem:[#allocation8] sm:$0x1]
      %v153 = vlaneseq
      %v154 = vshrl.u32 %v153, 7
      %v155 = vsub.s32 0, %v154
      %v156 = vrot.slane %v151, %v155
      %v158 = vadd.f32 %v150, %v156
      %v159 = vmax.f32 %v158, 0.0
      %160 = vst [vmem:[#allocation9] sm:$0xff] %v159
    $region33: #{fc_block_apply.1} parent=1 // pred_fallthru
      _
    // Predicated region
    $region34: #{fc_block_apply.1} parent=1 // pred_check
      _
    $region35: #{fc_block_apply.1} parent=1 // pred_check_branch
      %162 = sbr.rel (0) target = $region37
    $region36: #{fc_block_apply.1} parent=1 // pred_region
      %s164 = ssub.s32 128, 128
      %165 = vsyncadd [#allocation5], %s164
      %s167 = sshll.u32 [#allocation9], 4
      %s168 = int_to_ptr.vmem [resolvable:$true] %s167
      %170 = dma.vmem_to_hbm [thread:$0]  %s168, 128, %s3, [#allocation5]
    $region37: #{fc_block_apply.1} parent=1 // pred_fallthru
      _
    // Predicated region
    $region38: #{fc_block_apply.1} parent=1 // pred_check
      _
    $region39: #{fc_block_apply.1} parent=1 // pred_check_branch
      %172 = sbr.rel (0) target = $region41
    $region40: #{fc_block_apply.1} parent=1 // pred_region
      %173 = dma.done [#allocation5], 128
    $region41: #{fc_block_apply.1} parent=1 // pred_fallthru
      _
    %174 = vsyncpa [#allocation4], 1
    %175 = vsyncpa [#allocation7], 1
    %176 = vsyncpa [#allocation5], 1

</llo_original>
